<compile_context>
chip_gen: v5e
topology: v5e:2x2
jax: 0.10.0
libtpu: 0.0.40
codegen_flags: <defaults>
</compile_context>

<pallas_src>
import functools

import jax
import jax.numpy as jnp
from jax.experimental import pallas as pl
from jax.experimental.pallas import tpu as pltpu


def _round_up(x, m):
    return ((x + m - 1) // m) * m


def _focal_factor(one_minus_p, gamma):
    """(1 - p) ** gamma, lowered cheaply."""
    if isinstance(gamma, int) or (isinstance(gamma, float) and float(gamma).is_integer()):
        # integer_pow -> a couple of VPU multiplies.
        return one_minus_p ** int(gamma)
    # Float gamma: exp/log land on the EUP slot.  Clamp against p > 1 (possible
    # from rounding / bf16 probability inputs) which would give log(<0) = NaN.
    one_minus_p = jnp.maximum(one_minus_p, 0.0)
    # (1-p)==0 -> log=-inf -> exp=0, matching (1-p)**gamma for gamma>0.
    return jnp.exp(jnp.float32(gamma) * jnp.log(one_minus_p))


def _vmem_capacity_bytes():
    """Physical VMEM per TensorCore (generation-aware)."""
    try:
        return int(pltpu.get_tpu_info().vmem_capacity_bytes)
    except Exception:
        return 64 * 1024 * 1024        # conservative fallback (v7x per-TC)


def _vmem_limit_bytes(cap):
    # 96 MiB on v5e/v6e (128 MiB physical), 48 MiB on v7x (64 MiB physical).
    return int(min(cap * 3 // 4, 96 * 1024 * 1024))


def _pick_tile_n(n, c, itemsize, cap):
    """Rows per logits tile, sized against the scoped-VMEM budget."""
    c_pad = _round_up(c, 128)          # VMEM lane padding of (.., C) tiles
    # Per-row VMEM bytes:
    #   2x double-buffered logits tile (native dtype, lane-padded)
    # + ~5 f32 element-wise intermediates (x, xs, exp, iota, where), lane-padded
    # + 2x double-buffered (rows, 1) label tile (lane-padded to 128)
    per_row = 2 * itemsize * c_pad + 5 * 4 * c_pad + 2 * 4 * 128
    budget = min(cap // 2, 64 * 1024 * 1024)   # leave compiler-scratch headroom
    rows = budget // max(per_row, 1)
    rows = max(8, min(32768, (rows // 8) * 8))
    return int(min(rows, _round_up(n, 8)))


# --------------------------------------------------------------------------
# logit=True path: stream logits tiles, log-softmax + gather + focal + reduce.
# --------------------------------------------------------------------------
def _focal_from_logits_kernel(y_pre_ref, y_ref, out_ref, acc_ref, *,
                              gamma, n_total, tile_n, steps_per_core):
    p = pl.program_id(0)        # per-TensorCore split  ("parallel")
    i = pl.program_id(1)        # streaming / reduction ("arbitrary")

    @pl.when(i == 0)
    def _():
        acc_ref[...] = jnp.zeros_like(acc_ref)

    x = y_pre_ref[...].astype(jnp.float32)          # (tile_n, C), upcast in-kernel
    labels = y_ref[...]                             # (tile_n, 1) int32
    t, c = x.shape

    # Numerically-stable log-softmax over the class axis (dim=1).
    m = jnp.max(x, axis=1, keepdims=True)           # (tile_n, 1)
    xs = x - m
    lse = jnp.log(jnp.sum(jnp.exp(xs), axis=1, keepdims=True))   # (tile_n, 1)

    # Gather xs[r, label[r]] via one-hot mask + row reduction.
    col_ids = jax.lax.broadcasted_iota(jnp.int32, (t, c), 1)
    onehot = col_ids == labels
    x_lab = jnp.sum(jnp.where(onehot, xs, 0.0), axis=1, keepdims=True)

    logp = x_lab - lse                               # log P   (tile_n, 1)
    prob = jnp.exp(logp)                             # P
    focal = _focal_factor(1.0 - prob, gamma) * logp  # (1-P)**g * log(P)

    # Mask rows past the global N (covers ragged last block AND clamped
    # overshoot steps on the second core).  where() selects, so NaN/Inf in the
    # garbage rows never reaches the sum.
    step = p * steps_per_core + i                    # un-clamped global step
    row_ids = step * tile_n + jax.lax.broadcasted_iota(jnp.int32, (t, 1), 0)
    acc_ref[...] += jnp.sum(jnp.where(row_ids < n_total, focal, 0.0))

    @pl.when(i == pl.num_programs(1) - 1)
    def _():
        # Lane-dense (8,128) per-core partial-sum block; summed in the wrapper.
        out_ref[...] = jnp.broadcast_to(acc_ref[...], out_ref.shape)


def _focal_from_logits(y_pre, y, gamma, tile_n=None):
    n, c = y_pre.shape
    itemsize = jnp.dtype(y_pre.dtype).itemsize
    cap = _vmem_capacity_bytes()
    if tile_n is None:
        tile_n = _pick_tile_n(n, c, itemsize, cap)

    total_steps = -(-n // tile_n)                  # cdiv: ragged last block OK
    ncores = 2 if total_steps >= 2 else 1          # v7x megacore split
    steps_per_core = -(-total_steps // ncores)

    y2d = y.reshape(n, 1)

    def in_map(p, i):
        # Clamp overshoot steps (second core may have fewer real steps); the
        # in-kernel global-row mask zeroes their contribution.
        return (jnp.minimum(p * steps_per_core + i, total_steps - 1), 0)

    kernel = functools.partial(
        _focal_from_logits_kernel, gamma=gamma, n_total=n,
        tile_n=tile_n, steps_per_core=steps_per_core)

    cost = pl.CostEstimate(
        flops=6 * n * c,
        transcendentals=n * c + 3 * n,
        bytes_accessed=n * c * itemsize + n * 4 + ncores * 8 * 128 * 4)

    out = pl.pallas_call(
        kernel,
        out_shape=jax.ShapeDtypeStruct((ncores * 8, 128), jnp.float32),
        grid=(ncores, steps_per_core),
        in_specs=[
            pl.BlockSpec((tile_n, c), in_map),     # native dtype, cast in kernel
            pl.BlockSpec((tile_n, 1), in_map),
        ],
        out_specs=pl.BlockSpec((8, 128), lambda p, i: (p, 0)),
        scratch_shapes=[pltpu.VMEM((1, 1), jnp.float32)],
        compiler_params=pltpu.CompilerParams(
            dimension_semantics=("parallel", "arbitrary"),
            vmem_limit_bytes=_vmem_limit_bytes(cap),
        ),
        cost_estimate=cost,
    )(y_pre, y2d)

    per_core = out.reshape(ncores, 8 * 128)[:, 0]
    return -(jnp.sum(per_core) / jnp.float32(n))


# --------------------------------------------------------------------------
# logit=False path: label probabilities gathered in the wrapper; the kernel
# only sees a lane-dense (M, 128) slab of P values.  No in-kernel mask:
# padding with ones makes padded lanes contribute exactly 0.
# --------------------------------------------------------------------------
def _focal_from_probs_kernel(p_ref, out_ref, acc_ref, *, gamma):
    i = pl.program_id(0)

    @pl.when(i == 0)
    def _():
        acc_ref[...] = jnp.zeros_like(acc_ref)

    prob = p_ref[...].astype(jnp.float32)                  # (tile_m, 128)
    focal = _focal_factor(1.0 - prob, gamma) * jnp.log(prob)
    acc_ref[...] += jnp.sum(focal)

    @pl.when(i == pl.num_programs(0) - 1)
    def _():
        out_ref[...] = acc_ref[...]


def _focal_from_probs(p_flat, gamma):
    n = p_flat.shape[0]
    cap = _vmem_capacity_bytes()
    m_rows = max(8, _round_up(-(-n // 128), 8))       # rows of 128 lanes, mult of 8
    tile_m = min(8192, m_rows)                        # big tiles: overhead-bound kernel
    m_rows = _round_up(m_rows, tile_m)                # tile divides rows evenly
    padded = m_rows * 128
    if padded > n:
        # Pad with ones: (1-1)**g * log(1) == 0 for both integer and float gamma,
        # so padded lanes contribute nothing -> no index mask needed in-kernel.
        p_flat = jnp.concatenate(
            [p_flat, jnp.ones((padded - n,), dtype=p_flat.dtype)])
    p2d = p_flat.reshape(m_rows, 128)

    itemsize = jnp.dtype(p2d.dtype).itemsize
    kernel = functools.partial(_focal_from_probs_kernel, gamma=gamma)
    cost = pl.CostEstimate(flops=4 * padded, transcendentals=2 * padded,
                           bytes_accessed=padded * itemsize + 4)

    out = pl.pallas_call(
        kernel,
        out_shape=jax.ShapeDtypeStruct((1, 1), jnp.float32),
        grid=(m_rows // tile_m,),
        in_specs=[pl.BlockSpec((tile_m, 128), lambda i: (i, 0))],
        out_specs=pl.BlockSpec((1, 1), lambda i: (0, 0)),
        scratch_shapes=[pltpu.VMEM((1, 1), jnp.float32)],
        compiler_params=pltpu.CompilerParams(
            dimension_semantics=("arbitrary",),
            vmem_limit_bytes=_vmem_limit_bytes(cap),
        ),
        cost_estimate=cost,
    )(p2d)
    return -(out[0, 0] / jnp.float32(n))


# --------------------------------------------------------------------------
# Public wrapper: matches FocalCrossEntropyLoss.forward semantics.
# --------------------------------------------------------------------------
def focal_cross_entropy_loss(y_pre, y, *, gamma=2, logit=False, _tile_n=None):
    """y_pre: (N, C) float array, y: (N,) int labels. Returns scalar float32."""
    n, c = y_pre.shape
    y = y.astype(jnp.int32)
    if logit:
        return _focal_from_logits(y_pre, y, gamma, tile_n=_tile_n)
    # logit=False: gather P = Y_pre[i, Y[i]] in the wrapper (HBM traffic / C),
    # feed only the gathered probabilities to the focal/mean kernel.
    # TODO(synk): if profiling shows XLA lowering this minor-axis gather to a
    # one-hot matmul or per-row loop, move the gather into a streamed Pallas
    # kernel (same one-hot + row-reduce trick as the logits path).
    p = jnp.take_along_axis(y_pre, y.reshape(n, 1), axis=1).reshape(n)
    return _focal_from_probs(p, gamma)


def _reference(y_pre, y, gamma=2, logit=False):
    if logit:
        y_pre = jax.nn.softmax(y_pre, axis=1)
    p = y_pre[jnp.arange(y.shape[0]), y]
    return -jnp.mean((1.0 - p) ** gamma * jnp.log(p))


if __name__ == "__main__":
    key = jax.random.PRNGKey(0)
    k1, k2, k3, k4 = jax.random.split(key, 4)

    # Small shapes consistent with the module: N samples x C classes.
    N, C = 8, 32
    logits = jax.random.normal(k1, (N, C), dtype=jnp.float32)
    probs = jax.nn.softmax(logits, axis=1)
    y = jax.random.randint(k2, (N,), 0, C, dtype=jnp.int32)

    # logit=False (inputs are probabilities)
    loss = jax.block_until_ready(
        focal_cross_entropy_loss(probs, y, gamma=2, logit=False))
    ref = _reference(probs, y, gamma=2, logit=False)
    assert jnp.allclose(loss, ref, rtol=1e-5, atol=1e-6), (loss, ref)

    # logit=True (softmax computed inside the kernel, log-softmax form)
    loss_l = jax.block_until_ready(
        focal_cross_entropy_loss(logits, y, gamma=2, logit=True))
    ref_l = _reference(logits, y, gamma=2, logit=True)
    assert jnp.allclose(loss_l, ref_l, rtol=1e-5, atol=1e-6), (loss_l, ref_l)

    # Multi-step grid + ragged final tile + 2-way "parallel" split (even split).
    N2, C2 = 50, 32
    logits2 = jax.random.normal(k3, (N2, C2), dtype=jnp.float32)
    probs2 = jax.nn.softmax(logits2, axis=1)
    y2 = jax.random.randint(k4, (N2,), 0, C2, dtype=jnp.int32)

    loss2 = jax.block_until_ready(
        focal_cross_entropy_loss(logits2, y2, gamma=2, logit=True, _tile_n=16))
    ref2 = _reference(logits2, y2, gamma=2, logit=True)
    assert jnp.allclose(loss2, ref2, rtol=1e-5, atol=1e-6), (loss2, ref2)

    # Odd split: 7 total steps over 2 "cores" -> exercises clamped overshoot step.
    loss2b = jax.block_until_ready(
        focal_cross_entropy_loss(logits2, y2, gamma=2, logit=True, _tile_n=8))
    assert jnp.allclose(loss2b, ref2, rtol=1e-5, atol=1e-6), (loss2b, ref2)

    # logit=False with padding (padded lanes must contribute exactly zero).
    loss3 = jax.block_until_ready(
        focal_cross_entropy_loss(probs2, y2, gamma=2, logit=False))
    ref3 = _reference(probs2, y2, gamma=2, logit=False)
    assert jnp.allclose(loss3, ref3, rtol=1e-5, atol=1e-6), (loss3, ref3)

    # Float gamma (EUP exp/log path + clamp), both paths.
    loss4 = jax.block_until_ready(
        focal_cross_entropy_loss(probs2, y2, gamma=1.5, logit=False))
    ref4 = _reference(probs2, y2, gamma=1.5, logit=False)
    assert jnp.allclose(loss4, ref4, rtol=1e-5, atol=1e-6), (loss4, ref4)

    loss5 = jax.block_until_ready(
        focal_cross_entropy_loss(logits2, y2, gamma=1.5, logit=True, _tile_n=16))
    ref5 = _reference(logits2, y2, gamma=1.5, logit=True)
    assert jnp.allclose(loss5, ref5, rtol=1e-5, atol=1e-6), (loss5, ref5)

    print("KERNEL_OK")
</pallas_src>

<mosaic_0001>
module attributes {stable_mosaic.version = 11 : i64} {
  func.func @_focal_from_probs_kernel(%arg0: i32, %arg1: memref<8x128xf32, #tpu.memory_space<vmem>>, %arg2: memref<1x1xf32, #tpu.memory_space<vmem>>, %arg3: memref<1x1xf32, #tpu.memory_space<vmem>>) attributes {dimension_semantics = [#tpu.dimension_semantics<arbitrary>], iteration_bounds = array<i64: 1>, scalar_prefetch = 0 : i64, scratch_operands = 1 : i64, tpu.core_type = #tpu.core_type<tc>, window_params = [{transform_indices = @transform_0, window_bounds = array<i64: 8, 128>}, {pipeline_mode = #tpu.pipeline_mode<synchronous>, transform_indices = @transform_1, window_bounds = array<i64: 1, 1>}]} {
    %c0_i32 = arith.constant 0 : i32
    %0 = arith.cmpi eq, %arg0, %c0_i32 : i32
    %1 = arith.extui %0 : i1 to i32
    %c0_i32_0 = arith.constant 0 : i32
    %2 = arith.cmpi ne, %1, %c0_i32_0 : i32
    scf.if %2 {
      %cst_9 = arith.constant 0.000000e+00 : f32
      %20 = vector.broadcast %cst_9 : f32 to vector<1x1xf32>
      %c0_10 = arith.constant 0 : index
      %c0_11 = arith.constant 0 : index
      %21 = vector.load %arg3[%c0_10, %c0_11] : memref<1x1xf32, #tpu.memory_space<vmem>>, vector<1x1xf32>
      tpu.vector_store %arg3[%c0_10, %c0_11], %20 {strides = array<i32>} : memref<1x1xf32, #tpu.memory_space<vmem>>, vector<1x1xf32>,
    } else {
    }
    %c0 = arith.constant 0 : index
    %c0_1 = arith.constant 0 : index
    %3 = vector.load %arg1[%c0, %c0_1] : memref<8x128xf32, #tpu.memory_space<vmem>>, vector<8x128xf32>
    %cst = arith.constant 1.000000e+00 : f32
    %4 = vector.broadcast %cst : f32 to vector<8x128xf32>
    %5 = arith.subf %4, %3 : vector<8x128xf32>
    %6 = arith.mulf %5, %5 : vector<8x128xf32>
    %7 = math.log %3 : vector<8x128xf32>
    %8 = arith.mulf %6, %7 : vector<8x128xf32>
    %c0_2 = arith.constant 0 : index
    %c0_3 = arith.constant 0 : index
    %9 = vector.load %arg3[%c0_2, %c0_3] : memref<1x1xf32, #tpu.memory_space<vmem>>, vector<1x1xf32>
    %10 = vector.shape_cast %8 : vector<8x128xf32> to vector<1x8x128xf32>
    %cst_4 = arith.constant dense<0.000000e+00> : vector<1xf32>
    %11 = vector.multi_reduction <add>, %10, %cst_4 [1, 2] : vector<1x8x128xf32> to vector<1xf32>
    %12 = vector.shape_cast %11 : vector<1xf32> to vector<1x1x1xf32>
    %13 = vector.extract %12[0, 0, 0] : f32 from vector<1x1x1xf32>
    %14 = vector.broadcast %13 : f32 to vector<1x1xf32>
    %15 = arith.addf %9, %14 : vector<1x1xf32>
    %c0_5 = arith.constant 0 : index
    %c0_6 = arith.constant 0 : index
    %16 = vector.load %arg3[%c0_5, %c0_6] : memref<1x1xf32, #tpu.memory_space<vmem>>, vector<1x1xf32>
    tpu.vector_store %arg3[%c0_5, %c0_6], %15 {strides = array<i32>} : memref<1x1xf32, #tpu.memory_space<vmem>>, vector<1x1xf32>,
    %c0_i32_7 = arith.constant 0 : i32
    %17 = arith.cmpi eq, %arg0, %c0_i32_7 : i32
    %18 = arith.extui %17 : i1 to i32
    %c0_i32_8 = arith.constant 0 : i32
    %19 = arith.cmpi ne, %18, %c0_i32_8 : i32
    scf.if %19 {
      %c0_9 = arith.constant 0 : index
      %c0_10 = arith.constant 0 : index
      %20 = vector.load %arg3[%c0_9, %c0_10] : memref<1x1xf32, #tpu.memory_space<vmem>>, vector<1x1xf32>
      %c0_11 = arith.constant 0 : index
      %c0_12 = arith.constant 0 : index
      %21 = vector.load %arg2[%c0_11, %c0_12] : memref<1x1xf32, #tpu.memory_space<vmem>>, vector<1x1xf32>
      tpu.vector_store %arg2[%c0_11, %c0_12], %20 {strides = array<i32>} : memref<1x1xf32, #tpu.memory_space<vmem>>, vector<1x1xf32>,
    } else {
    }
    return
  }
  func.func @transform_0(%arg0: i32) -> (i32, i32) {
    %c0_i32 = arith.constant 0 : i32
    %c0_i32_0 = arith.constant 0 : i32
    return %arg0, %c0_i32 : i32, i32
  }
  func.func @transform_1(%arg0: i32) -> (i32, i32) {
    %c0_i32 = arith.constant 0 : i32
    %c0_i32_0 = arith.constant 0 : i32
    %c0_i32_1 = arith.constant 0 : i32
    return %c0_i32, %c0_i32_0 : i32, i32
  }
}

</mosaic_0001>

<llo_original>
// kernel: tpu_custom_call.1
$region0: #{tpu_custom_call.1}
  #allocation0 [shape = 'u32[]', space=smem, size = 0x4, offset = 0x4, fixed_abs, tag = 'smem constant byte address 0x4 - core index']
  #allocation1 [shape = 'u32[72,128]{1,0:T(1,128)}', space=vmem, size = 0x9000, scoped, tag = 'internal scratch']
  #allocation2 [shape = 'f32[1,1]{1,0:T(1,128)}', space=vmem, size = 0x200, scoped, tag = 'scratch operand']
  %s0 = inlined_call_operand.hbm [shape: f32[8,128], index: 0, kind: input, shape index: {}]
  %s1 = inlined_call_operand.hbm [shape: f32[1,1], index: 1, kind: output, shape index: {}]
  %s2 = sld [smem:[#allocation0]]
  $region26: #{tpu_custom_call.1} parent=0
    _
  %s4 = ssub.s32 1, %s2
  %s5 = scalar_select 0, %s4, %s2
  $region1: #{tpu_custom_call.1} parent=0
    #allocation3 [shape = 'u8[4096]{0}', space=vmem, size = 0x1000, scoped, tag = 'input window, operand 0, single buffered']
    #allocation4 [shape = 's32[1]{0}', space=sflag, size = 0x4, scoped, tag = 'scoped memory for tpu_custom_call.1']
    #allocation5 [shape = 's32[1]{0}', space=sflag, size = 0x4, scoped, tag = 'scoped memory for tpu_custom_call.1']
    #allocation6 [shape = 'u8[512]{0}', space=vmem, size = 0x400, scoped, tag = 'output window, operand 0, single buffered']
    %6 = vsyncpa [#allocation4], 0
    %7 = vsyncpa [#allocation5], 0
    // Predicated region
    $region2: #{tpu_custom_call.1} parent=1 // pred_check
      _
    $region3: #{tpu_custom_call.1} parent=1 // pred_check_branch
      %9 = sbr.rel (0) target = $region5
    $region4: #{tpu_custom_call.1} parent=1 // pred_region
      %11 = vsyncadd [#allocation4], 0
      %s13 = sshll.u32 %s0, 4
      %s14 = int_to_ptr.hbm [resolvable:$true] %s13
      %s15 = sshll.u32 [#allocation3], 4
      %s16 = int_to_ptr.vmem [resolvable:$true] %s15
      %18 = dma.hbm_to_vmem [thread:$0]  %s14, 128, %s16, [#allocation4]
    $region5: #{tpu_custom_call.1} parent=1 // pred_fallthru
      _
    // Predicated region
    $region6: #{tpu_custom_call.1} parent=1 // pred_check
      _
    $region7: #{tpu_custom_call.1} parent=1 // pred_check_branch
      %20 = sbr.rel (0) target = $region9
    $region8: #{tpu_custom_call.1} parent=1 // pred_region
      %22 = dma.done [#allocation4], 128
    $region9: #{tpu_custom_call.1} parent=1 // pred_fallthru
      _
    %p23 = scmp.eq.s32.totalorder 0, 0
    // Predicated region
    $region10: #{tpu_custom_call.1} parent=1 // pred_check
      %p24 = pneg %p23
    $region11: #{tpu_custom_call.1} parent=1 // pred_check_branch
      %26 = sbr.rel (%p24) target = $region13
    $region12: #{tpu_custom_call.1} parent=1 // pred_region
      %vm27 = vcmask 0
      %28 = vst.msk [vmem:[#allocation2] sm:$0x1] %vm27, 0.0
    $region13: #{tpu_custom_call.1} parent=1 // pred_fallthru
      _
    %v29 = vld [vmem:[#allocation3] sm:$0xff]
    %v30 = vsub.f32 1.0, %v29
    %v31 = vmul.f32 %v30, %v30
    %v32 = vlog2.pop %v29
    %v33 = vmul.f32 %v32, 0.6931472
    %v34 = vmul.f32 %v31, %v33
    %v35 = vld [vmem:[#allocation2] sm:$0x1]
    %36 = vadd.xlane.f32.xlu0 %v34
    %v37 = vpop.xlane.xlu0 %36
    %v38 = vrot.slane %v37, 4
    %v39 = vadd.f32 %v37, %v38
    %v40 = vrot.slane %v39, 2
    %v41 = vadd.f32 %v39, %v40
    %v42 = vrot.slane %v41, 1
    %v43 = vadd.f32 %v41, %v42
    %s44 = vtos %v43
    %v45 = vstv %s44
    %v46 = vadd.f32 %v35, %v45
    %vm47 = vcmask 0
    %48 = vst.msk [vmem:[#allocation2] sm:$0x1] %vm47, %v46
    // Predicated region
    $region14: #{tpu_custom_call.1} parent=1 // pred_check
      %p49 = pneg %p23
    $region15: #{tpu_custom_call.1} parent=1 // pred_check_branch
      %51 = sbr.rel (%p49) target = $region17
    $region16: #{tpu_custom_call.1} parent=1 // pred_region
      %v52 = vld [vmem:[#allocation2] sm:$0x1]
      %53 = vst.msk [vmem:[#allocation6] sm:$0x1] %vm47, %v52
    $region17: #{tpu_custom_call.1} parent=1 // pred_fallthru
      _
    // Predicated region
    $region18: #{tpu_custom_call.1} parent=1 // pred_check
      _
    $region19: #{tpu_custom_call.1} parent=1 // pred_check_branch
      %55 = sbr.rel (0) target = $region21
    $region20: #{tpu_custom_call.1} parent=1 // pred_region
      %57 = vsyncadd [#allocation5], 0
      %s59 = sshll.u32 [#allocation6], 4
      %s60 = int_to_ptr.vmem [resolvable:$true] %s59
      %s61 = sshll.u32 %s1, 4
      %s62 = int_to_ptr.hbm [resolvable:$true] %s61
      %64 = dma.vmem_to_hbm [thread:$0]  %s60, 16, %s62, [#allocation5]
    $region21: #{tpu_custom_call.1} parent=1 // pred_fallthru
      _
    // Predicated region
    $region22: #{tpu_custom_call.1} parent=1 // pred_check
      _
    $region23: #{tpu_custom_call.1} parent=1 // pred_check_branch
      %66 = sbr.rel (0) target = $region25
    $region24: #{tpu_custom_call.1} parent=1 // pred_region
      %68 = dma.done [#allocation5], 16
    $region25: #{tpu_custom_call.1} parent=1 // pred_fallthru
      _
    %69 = vsyncpa [#allocation4], 1
    %70 = vsyncpa [#allocation5], 1

</llo_original>
